<compile_context>
chip_gen: v7x
topology: tpu7x:2x2x1
jax: 0.10.0
libtpu: 0.0.40
codegen_flags: <defaults>
</compile_context>

<pallas_src>
import functools

import jax
import jax.numpy as jnp
from jax import lax
from jax.experimental import pallas as pl
from jax.experimental.pallas import tpu as pltpu


def input_encoder_kernel(x_ref, w_ref, b_ref, o_ref):
    # x_ref: [TM, feat_dim]
    # w_ref: [emb_dim, feat_dim]   (PyTorch nn.Linear layout, no transpose needed)
    # b_ref: [1, emb_dim]
    # o_ref: [TM, emb_dim]
    y = lax.dot_general(
        x_ref[...],
        w_ref[...],
        dimension_numbers=(((1,), (1,)), ((), ())),  # contract feat_dim with feat_dim
        preferred_element_type=jnp.float32,
    )
    o_ref[...] = (y + b_ref[...].astype(jnp.float32)).astype(o_ref.dtype)


def _pick_block_rows(n, feat_dim, emb_dim, itemsize, max_rows, vmem_budget):
    """Largest row tile (multiple of 8) whose double-buffered footprint fits VMEM."""
    resident = (emb_dim * feat_dim + emb_dim) * itemsize          # W + b (fetched once)
    per_row = 2 * (feat_dim + emb_dim) * itemsize                  # 2x-buffered X + out rows
    avail = max(vmem_budget - resident, per_row * 8)
    tm = min(max_rows, avail // per_row)
    tm = max(8, (tm // 8) * 8)
    # Small problems: a single tile covering N (rounded up to the sublane multiple).
    n_up = ((n + 7) // 8) * 8
    return min(tm, n_up)


def input_encoder_forward(A, X, weight, bias, pe_enc=False,
                          block_rows=1024, matmul_dtype=None):
    """JAX/Pallas equivalent of InputEncoder.forward(A, X) with pe_enc=False.

    A      : [N, N]   adjacency (unused when pe_enc=False; kept for signature parity)
    X      : [N, feat_dim]
    weight : [emb_dim, feat_dim]  (PyTorch nn.Linear layout)
    bias   : [emb_dim]
    """
    del A  # only needed for the laplacian-PE branch (not implemented)
    assert not pe_enc, "pe_enc=True path (laplacian_pe) not implemented in Pallas"

    N, feat_dim = X.shape
    emb_dim, feat_dim_w = weight.shape
    assert feat_dim_w == feat_dim
    out_dtype = X.dtype

    # Optional reduced-precision matmul inputs (accumulation stays f32 in-kernel).
    if matmul_dtype is not None:
        X = X.astype(matmul_dtype)
        weight = weight.astype(matmul_dtype)

    itemsize = max(jnp.dtype(X.dtype).itemsize, jnp.dtype(weight.dtype).itemsize)
    # Conservative budget (<< 32 MiB default scoped limit; safe on v7x's 64 MiB VMEM).
    tm = _pick_block_rows(N, feat_dim, emb_dim, itemsize,
                          max_rows=block_rows, vmem_budget=24 << 20)

    # Pad the row axis so every (tm, feat_dim) tile is full (ragged last tile).
    n_pad = pl.cdiv(N, tm) * tm
    if n_pad != N:
        X = jnp.pad(X, ((0, n_pad - N), (0, 0)))
    grid = (n_pad // tm,)

    b2d = bias.reshape(1, emb_dim)  # 2-D so it tiles cleanly into VMEM

    bytes_accessed = (
        n_pad * feat_dim * jnp.dtype(X.dtype).itemsize
        + emb_dim * feat_dim * jnp.dtype(weight.dtype).itemsize
        + emb_dim * jnp.dtype(b2d.dtype).itemsize
        + n_pad * emb_dim * jnp.dtype(out_dtype).itemsize
    )
    cost = pl.CostEstimate(
        flops=2 * n_pad * feat_dim * emb_dim,
        transcendentals=0,
        bytes_accessed=bytes_accessed,
    )

    out = pl.pallas_call(
        input_encoder_kernel,
        out_shape=jax.ShapeDtypeStruct((n_pad, emb_dim), out_dtype),
        grid_spec=pltpu.PrefetchScalarGridSpec(
            num_scalar_prefetch=0,
            grid=grid,
            in_specs=[
                # X: tiled along the node axis; feat_dim is the full lane extent.
                pl.BlockSpec((tm, feat_dim), lambda i: (i, 0)),
                # Weight + bias: constant block index -> resident, fetched once.
                pl.BlockSpec((emb_dim, feat_dim), lambda i: (0, 0)),
                pl.BlockSpec((1, emb_dim), lambda i: (0, 0)),
            ],
            out_specs=pl.BlockSpec((tm, emb_dim), lambda i: (i, 0)),
        ),
        compiler_params=pltpu.CompilerParams(
            # Row tiles are independent -> parallel (shards across the 2 TCs on v7x).
            dimension_semantics=("parallel",)),
        cost_estimate=cost,
    )(X, weight, b2d)

    if n_pad != N:
        out = out[:N]
    return out


if __name__ == "__main__":
    key = jax.random.PRNGKey(0)
    k_a, k_x, k_w, k_b = jax.random.split(key, 4)

    # Small shapes consistent with the module: N nodes, feat_dim features.
    N, feat_dim, emb_dim = 8, 16, 32

    # Adjacency matrix (only used by the laplacian-PE branch).
    A = (jax.random.uniform(k_a, (N, N)) > 0.5).astype(jnp.float32)
    A = jnp.maximum(A, A.T)  # symmetric, like an undirected graph

    X = jax.random.normal(k_x, (N, feat_dim), dtype=jnp.float32)

    # Deterministic nn.Linear-style init: U(-1/sqrt(feat_dim), 1/sqrt(feat_dim))
    bound = 1.0 / (feat_dim ** 0.5)
    weight = jax.random.uniform(k_w, (emb_dim, feat_dim),
                                minval=-bound, maxval=bound, dtype=jnp.float32)
    bias = jax.random.uniform(k_b, (emb_dim,),
                              minval=-bound, maxval=bound, dtype=jnp.float32)

    # --- test 1: tiny demo shape (single tile) ---
    out = input_encoder_forward(A, X, weight, bias, pe_enc=False)
    out = jax.block_until_ready(out)
    ref = X @ weight.T + bias
    assert out.shape == (N, emb_dim)
    assert jnp.allclose(out, ref, atol=1e-5, rtol=1e-5)

    # --- test 2: ragged N with a multi-tile grid (exercises tiling + padding) ---
    N2 = 300
    k_x2 = jax.random.fold_in(k_x, 1)
    X2 = jax.random.normal(k_x2, (N2, feat_dim), dtype=jnp.float32)
    A2 = jnp.zeros((N2, N2), dtype=jnp.float32)
    out2 = input_encoder_forward(A2, X2, weight, bias, pe_enc=False, block_rows=128)
    out2 = jax.block_until_ready(out2)
    ref2 = X2 @ weight.T + bias
    assert out2.shape == (N2, emb_dim)
    assert jnp.allclose(out2, ref2, atol=1e-5, rtol=1e-5)

    print("KERNEL_OK")
</pallas_src>

<mosaic_0001>
module attributes {stable_mosaic.version = 11 : i64} {
  func.func @input_encoder_kernel(%arg0: i32, %arg1: memref<8x16xf32, #tpu.memory_space<vmem>>, %arg2: memref<32x16xf32, #tpu.memory_space<vmem>>, %arg3: memref<1x32xf32, #tpu.memory_space<vmem>>, %arg4: memref<8x32xf32, #tpu.memory_space<vmem>>) attributes {dimension_semantics = [#tpu.dimension_semantics<parallel>], iteration_bounds = array<i64: 1>, scalar_prefetch = 0 : i64, scratch_operands = 0 : i64, tpu.core_type = #tpu.core_type<tc>, window_params = [{transform_indices = @transform_0, window_bounds = array<i64: 8, 16>}, {pipeline_mode = #tpu.pipeline_mode<synchronous>, transform_indices = @transform_1, window_bounds = array<i64: 32, 16>}, {pipeline_mode = #tpu.pipeline_mode<synchronous>, transform_indices = @transform_2, window_bounds = array<i64: 1, 32>}, {transform_indices = @transform_3, window_bounds = array<i64: 8, 32>}]} {
    %c0 = arith.constant 0 : index
    %c0_0 = arith.constant 0 : index
    %0 = vector.load %arg1[%c0, %c0_0] : memref<8x16xf32, #tpu.memory_space<vmem>>, vector<8x16xf32>
    %c0_1 = arith.constant 0 : index
    %c0_2 = arith.constant 0 : index
    %1 = vector.load %arg2[%c0_1, %c0_2] : memref<32x16xf32, #tpu.memory_space<vmem>>, vector<32x16xf32>
    %cst = arith.constant dense<0.000000e+00> : vector<8x32xf32>
    %2 = tpu.matmul %0, %1, %cst {dimension_numbers = #tpu.dot_dimension_numbers<[1], [1], [0], [0], [0, 0, 1, 0], [], []>} : vector<8x16xf32>, vector<32x16xf32>, vector<8x32xf32> -> vector<8x32xf32>
    %c0_3 = arith.constant 0 : index
    %c0_4 = arith.constant 0 : index
    %3 = vector.load %arg3[%c0_3, %c0_4] : memref<1x32xf32, #tpu.memory_space<vmem>>, vector<1x32xf32>
    %4 = vector.broadcast %3 : vector<1x32xf32> to vector<8x32xf32>
    %5 = arith.addf %2, %4 : vector<8x32xf32>
    %c0_5 = arith.constant 0 : index
    %c0_6 = arith.constant 0 : index
    %6 = vector.load %arg4[%c0_5, %c0_6] : memref<8x32xf32, #tpu.memory_space<vmem>>, vector<8x32xf32>
    tpu.vector_store %arg4[%c0_5, %c0_6], %5 {strides = array<i32>} : memref<8x32xf32, #tpu.memory_space<vmem>>, vector<8x32xf32>,
    return
  }
  func.func @transform_0(%arg0: i32) -> (i32, i32) {
    %c0_i32 = arith.constant 0 : i32
    %c0_i32_0 = arith.constant 0 : i32
    return %arg0, %c0_i32 : i32, i32
  }
  func.func @transform_1(%arg0: i32) -> (i32, i32) {
    %c0_i32 = arith.constant 0 : i32
    %c0_i32_0 = arith.constant 0 : i32
    %c0_i32_1 = arith.constant 0 : i32
    return %c0_i32, %c0_i32_0 : i32, i32
  }
  func.func @transform_2(%arg0: i32) -> (i32, i32) {
    %c0_i32 = arith.constant 0 : i32
    %c0_i32_0 = arith.constant 0 : i32
    %c0_i32_1 = arith.constant 0 : i32
    return %c0_i32, %c0_i32_0 : i32, i32
  }
  func.func @transform_3(%arg0: i32) -> (i32, i32) {
    %c0_i32 = arith.constant 0 : i32
    %c0_i32_0 = arith.constant 0 : i32
    return %arg0, %c0_i32 : i32, i32
  }
}

</mosaic_0001>

<llo_original>
// kernel: tpu_custom_call.1
$region0: #{tpu_custom_call.1}
  #allocation0 [shape = 'u32[]', space=smem, size = 0x4, offset = 0x4, fixed_abs, tag = 'smem constant byte address 0x4 - core index']
  #allocation1 [shape = 'u32[144,128]{1,0:T(1,128)}', space=vmem, size = 0x12000, scoped, tag = 'internal scratch']
  %s0 = inlined_call_operand.vmem [shape: f32[8,16], index: 0, kind: input, shape index: {}]
  %s1 = inlined_call_operand.vmem [shape: f32[32,16], index: 1, kind: input, shape index: {}]
  %s2 = inlined_call_operand.vmem [shape: f32[1,32], index: 2, kind: input, shape index: {}]
  %s3 = inlined_call_operand.hbm [shape: f32[8,32], index: 3, kind: output, shape index: {}]
  %s4 = sld [smem:[#allocation0]]
  $region22: #{tpu_custom_call.1} parent=0
    _
  %s6 = ssub.s32 1, %s4
  %s7 = scalar_select 0, %s6, %s4
  $region1: #{tpu_custom_call.1} parent=0
    #allocation2 [shape = 'u8[4096]{0}', space=vmem, size = 0x1000, scoped, tag = 'output window, operand 0, single buffered']
    #allocation3 [shape = 's32[1]{0}', space=sflag, size = 0x4, scoped, tag = 'scoped memory for tpu_custom_call.1']
    %8 = vsyncpa [#allocation3], 0
    // Predicated region
    $region2: #{tpu_custom_call.1} parent=1 // pred_check
      _
    $region3: #{tpu_custom_call.1} parent=1 // pred_check_branch
      %10 = sbr.rel (0) target = $region5
    $region4: #{tpu_custom_call.1} parent=1 // pred_region
      _
    $region5: #{tpu_custom_call.1} parent=1 // pred_fallthru
      _
    // Predicated region
    $region6: #{tpu_custom_call.1} parent=1 // pred_check
      _
    $region7: #{tpu_custom_call.1} parent=1 // pred_check_branch
      %12 = sbr.rel (0) target = $region9
    $region8: #{tpu_custom_call.1} parent=1 // pred_region
      _
    $region9: #{tpu_custom_call.1} parent=1 // pred_fallthru
      _
    // Predicated region
    $region10: #{tpu_custom_call.1} parent=1 // pred_check
      _
    $region11: #{tpu_custom_call.1} parent=1 // pred_check_branch
      %14 = sbr.rel (0) target = $region13
    $region12: #{tpu_custom_call.1} parent=1 // pred_region
      _
    $region13: #{tpu_custom_call.1} parent=1 // pred_fallthru
      _
    %v15 = vld [vmem:[%s0] sm:$0xff]
    %v16 = vld [vmem:[%s1] sm:$0xff]
    %v17 = vld [vmem:[%s1 + $0x8] sm:$0xff]
    %v18 = vld [vmem:[%s1 + $0x10] sm:$0xff]
    %v19 = vld [vmem:[%s1 + $0x18] sm:$0xff]
    %v20 = vld [vmem:[%s2] sm:$0x1]
    %v22 = vlaneseq
    %v23 = vshrl.u32 %v22, 7
    %v24 = vsub.s32 0, %v23
    %v25 = vrot.slane %v20, %v24
    %vm27 = vcmask 130048
    %v29 = vsel %vm27, %v15, 0
    %v32 = vsel %vm27, %v16, 0
    %v35 = vsel %vm27, %v17, 0
    %v38 = vsel %vm27, %v18, 0
    %v41 = vsel %vm27, %v19, 0
    %43 = vmatprep.subr.mxu0 0.0
    %44 = vmatpush1.xpose.msra.mxu0 %v32
    %45 = vmatprep.subr.mxu0 0.0
    %46 = vmatpush1.xpose.msra.mxu0 %v35
    %47 = vmatprep.subr.mxu0 0.0
    %48 = vmatpush1.xpose.msra.mxu0 %v38
    %49 = vmatprep.subr.mxu0 0.0
    %50 = vmatpush1.xpose.msra.mxu0 %v41
    %51 = vmatprep.subr.mxu0 0.0
    %52 = vmatpush1.xpose.msra.mxu0 0.0
    %53 = vmatprep.subr.mxu0 0.0
    %54 = vmatpush1.xpose.msra.mxu0 0.0
    %55 = vmatprep.subr.mxu0 0.0
    %56 = vmatpush1.xpose.msra.mxu0 0.0
    %57 = vmatprep.subr.mxu0 0.0
    %58 = vmatpush1.xpose.msra.mxu0 0.0
    %59 = vmatprep.subr.mxu0 0.0
    %60 = vmatpush1.xpose.msra.mxu0 0.0
    %61 = vmatprep.subr.mxu0 0.0
    %62 = vmatpush1.xpose.msra.mxu0 0.0
    %63 = vmatprep.subr.mxu0 0.0
    %64 = vmatpush1.xpose.msra.mxu0 0.0
    %65 = vmatprep.subr.mxu0 0.0
    %66 = vmatpush1.xpose.msra.mxu0 0.0
    %67 = vmatprep.subr.mxu0 0.0
    %68 = vmatpush1.xpose.msra.mxu0 0.0
    %69 = vmatprep.subr.mxu0 0.0
    %70 = vmatpush1.xpose.msra.mxu0 0.0
    %71 = vmatprep.subr.mxu0 0.0
    %72 = vmatpush1.xpose.msra.mxu0 0.0
    %73 = vmatprep.subr.mxu0 0.0
    %74 = vmatpush1.xpose.msra.mxu0 0.0
    %75 = vmatprep.subr.mxu0 0.0
    %76 = vmatpush1.xpose.msra.mxu0 0.0
    %77 = vmatprep.subr.mxu0 0.0
    %78 = vmatpush1.xpose.msra.mxu0 0.0
    %79 = vmatprep.subr.mxu0 0.0
    %80 = vmatpush1.xpose.msra.mxu0 0.0
    %81 = vmatprep.subr.mxu0 0.0
    %82 = vmatpush1.xpose.msra.mxu0 0.0
    %83 = vmatprep.subr.mxu0 0.0
    %84 = vmatpush1.xpose.msra.mxu0 0.0
    %85 = vmatprep.subr.mxu0 0.0
    %86 = vmatpush1.xpose.msra.mxu0 0.0
    %87 = vmatprep.subr.mxu0 0.0
    %88 = vmatpush1.xpose.msra.mxu0 0.0
    %89 = vmatprep.subr.mxu0 0.0
    %90 = vmatpush1.xpose.msra.mxu0 0.0
    %91 = vmatprep.subr.mxu0 0.0
    %92 = vmatpush1.xpose.msra.mxu0 0.0
    %93 = vmatprep.subr.mxu0 0.0
    %94 = vmatpush1.xpose.msra.mxu0 0.0
    %95 = vmatprep.subr.mxu0 0.0
    %96 = vmatpush1.xpose.msra.mxu0 0.0
    %97 = vmatprep.subr.mxu0 0.0
    %98 = vmatpush1.xpose.msra.mxu0 0.0
    %99 = vmatprep.subr.mxu0 0.0
    %100 = vmatpush1.xpose.msra.mxu0 0.0
    %101 = vmatprep.subr.mxu0 0.0
    %102 = vmatpush1.xpose.msra.mxu0 0.0
    %103 = vmatprep.subr.mxu0 0.0
    %104 = vmatpush1.xpose.msra.mxu0 0.0
    %105 = vmatprep.subr.mxu0 0.0
    %106 = vmatpush1.xpose.msra.mxu0 0.0
    %107 = vmatprep.mubr.f32.mxu0 0.0
    %108 = vmatmul.mubr.f32.gmra.mrb[0].mxu0 %v29
    %v109 = vpop.f32.mrb[0].mxu0
    %v110 = vadd.f32 %v25, %v109
    %v111 = vpop.f32.mrb[0].mxu0
    %112 = vdwg.mxu0
    %vm113 = vcmask 261120
    %114 = vst.msk [vmem:[#allocation2] sm:$0xff] %vm113, %v110
    // Predicated region
    $region14: #{tpu_custom_call.1} parent=1 // pred_check
      _
    $region15: #{tpu_custom_call.1} parent=1 // pred_check_branch
      %116 = sbr.rel (0) target = $region17
    $region16: #{tpu_custom_call.1} parent=1 // pred_region
      %s118 = ssub.s32 128, 128
      %119 = vsyncadd [#allocation3], %s118
      %s121 = sshll.u32 [#allocation2], 4
      %s122 = int_to_ptr.vmem [resolvable:$true] %s121
      %124 = dma.vmem_to_hbm [thread:$0]  %s122, 128, %s3, [#allocation3]
    $region17: #{tpu_custom_call.1} parent=1 // pred_fallthru
      _
    // Predicated region
    $region18: #{tpu_custom_call.1} parent=1 // pred_check
      _
    $region19: #{tpu_custom_call.1} parent=1 // pred_check_branch
      %126 = sbr.rel (0) target = $region21
    $region20: #{tpu_custom_call.1} parent=1 // pred_region
      %127 = dma.done [#allocation3], 128
    $region21: #{tpu_custom_call.1} parent=1 // pred_fallthru
      _
    %128 = vsyncpa [#allocation3], 1

</llo_original>
